<compile_context>
chip_gen: v6e
topology: v6e:2x2x1
jax: 0.10.0
libtpu: 0.0.40
codegen_flags: <defaults>
</compile_context>

<pallas_src>
import jax
import jax.numpy as jnp
from jax.experimental import pallas as pl
from jax.experimental.pallas import tpu as pltpu


def _round_up(x, m):
    return (x + m - 1) // m * m


def _h_swish_kernel(x_ref, o_ref):
    # h_swish(x) = x * relu6(x + 3) / 6  (pure VPU work, f32 internally)
    x = x_ref[...].astype(jnp.float32)
    y = x * (jnp.clip(x + 3.0, 0.0, 6.0) * (1.0 / 6.0))
    o_ref[...] = y.astype(o_ref.dtype)


def _h_swish_jnp(x):
    # Plain-JAX fallback for the <128-element ragged tail / tiny inputs.
    xf = x.astype(jnp.float32)
    return (xf * (jnp.clip(xf + 3.0, 0.0, 6.0) * (1.0 / 6.0))).astype(x.dtype)


# Per-buffer block-size cap. Pallas double-buffers input and output (4 buffers),
# so 4 MiB blocks use ~16 MiB of VMEM; vmem_limit_bytes=32 MiB (set below) keeps
# this safe on v5e/v6e/v7x with headroom for internal scratch.
_MAX_BLOCK_BYTES = 4 * 1024 * 1024
_VMEM_LIMIT_BYTES = 32 * 1024 * 1024


def _pick_layout(n, itemsize):
    """Choose (lane_width, block_rows, rows) for a flat array of n elems.

    Requires n % 128 == 0. lane_width is a multiple of 128 (lane-dense, unmasked
    stores); block_rows is a multiple of the dtype's native sublane tile; blocks
    grow to the byte cap; grid gets >=2 steps whenever rows allow it."""
    sub = 8 * max(1, 4 // itemsize)          # 8 rows f32, 16 bf16, 32 int8
    lane_w = 128
    for cand in (2048, 1024, 512, 256, 128):
        if n % cand == 0 and n // cand >= sub:
            lane_w = cand
            break
    rows = n // lane_w
    if rows <= sub:
        return lane_w, rows, rows            # one (or partial) native tile: full-dim block

    bm_cap_rows = max(sub, _MAX_BLOCK_BYTES // (lane_w * itemsize))
    bm = sub
    while bm * 2 <= bm_cap_rows and bm * 2 <= rows:
        bm *= 2

    # Ensure >= 2 grid steps so dimension_semantics=("parallel",) can shed work
    # onto both v7x TensorCores. Only triggers when everything fit in one block,
    # so on 1-TC chips (v5e/v6e) the cost is at most one extra ~0.35 us step.
    if -(-rows // bm) == 1:
        bm = _round_up(-(-rows // 2), sub)
    return lane_w, bm, rows


def h_swish(x):
    """Pallas TPU h_swish: x * relu6(x + 3) / 6 (float inputs, any shape)."""
    shape, dtype = x.shape, x.dtype
    itemsize = jnp.dtype(dtype).itemsize
    flat = x.reshape(-1)                     # contiguous reshape: layout plumbing, free
    n = flat.size

    n_tail = n % 128
    n_main = n - n_tail
    if n_main == 0:
        # Tiny input (<128 elements): not worth a kernel launch.
        return _h_swish_jnp(flat).reshape(shape)

    main = flat[:n_main] if n_tail else flat
    lane_w, bm, rows = _pick_layout(n_main, itemsize)
    x2 = main.reshape(rows, lane_w)
    grid_steps = -(-rows // bm)              # cdiv; Pallas masks the ragged last block

    out = pl.pallas_call(
        _h_swish_kernel,
        grid=(grid_steps,),
        in_specs=[pl.BlockSpec((bm, lane_w), lambda i: (i, 0))],
        out_specs=pl.BlockSpec((bm, lane_w), lambda i: (i, 0)),
        out_shape=jax.ShapeDtypeStruct((rows, lane_w), dtype),
        compiler_params=pltpu.CompilerParams(
            dimension_semantics=("parallel",),
            vmem_limit_bytes=_VMEM_LIMIT_BYTES),
        cost_estimate=pl.CostEstimate(
            flops=5 * n_main,
            transcendentals=0,
            bytes_accessed=2 * n_main * itemsize),
    )(x2)

    out_flat = out.reshape(-1)
    if n_tail:
        out_flat = jnp.concatenate([out_flat, _h_swish_jnp(flat[n_main:])])
    return out_flat.reshape(shape)


if __name__ == "__main__":
    key = jax.random.PRNGKey(0)
    fwd = jax.jit(h_swish)

    def ref_fn(v):
        return (v.astype(jnp.float32)
                * (jnp.clip(v.astype(jnp.float32) + 3.0, 0.0, 6.0) / 6.0)).astype(v.dtype)

    # Small NCHW activation, as h_swish sees inside MobileNetV3.
    x = jax.random.normal(key, (2, 4, 16, 16), jnp.float32) * 4.0
    y = jax.block_until_ready(fwd(x))
    assert y.shape == x.shape and y.dtype == x.dtype
    assert bool(jnp.all(jnp.isfinite(y)))
    assert bool(jnp.allclose(y, ref_fn(x), rtol=1e-6, atol=1e-5))

    # Larger shape: multi-step "parallel" grid + partial (masked) final row-block.
    x2 = jax.random.normal(jax.random.PRNGKey(1), (2, 112, 20, 20), jnp.float32) * 4.0
    y2 = jax.block_until_ready(fwd(x2))
    assert bool(jnp.allclose(y2, ref_fn(x2), rtol=1e-6, atol=1e-5))

    # Ragged element count: Pallas prefix + jnp tail (no full-array pad/slice pass).
    x3 = jax.random.normal(jax.random.PRNGKey(2), (2, 7, 11, 13), jnp.float32) * 4.0
    y3 = jax.block_until_ready(fwd(x3))
    assert bool(jnp.allclose(y3, ref_fn(x3), rtol=1e-6, atol=1e-5))

    # bf16: dtype-aware sublane tiling (16-row minimum blocks).
    x4 = (jax.random.normal(jax.random.PRNGKey(3), (2, 96, 14, 14), jnp.float32) * 4.0
          ).astype(jnp.bfloat16)
    y4 = jax.block_until_ready(fwd(x4))
    assert y4.dtype == jnp.bfloat16
    assert bool(jnp.allclose(y4.astype(jnp.float32), ref_fn(x4).astype(jnp.float32),
                             rtol=2e-2, atol=2e-2))

    print("KERNEL_OK")
</pallas_src>

<mosaic_0001>
module attributes {stable_mosaic.version = 11 : i64} {
  func.func @_h_swish_kernel(%arg0: i32, %arg1: memref<8x256xf32, #tpu.memory_space<vmem>>, %arg2: memref<8x256xf32, #tpu.memory_space<vmem>>) attributes {dimension_semantics = [#tpu.dimension_semantics<parallel>], iteration_bounds = array<i64: 1>, scalar_prefetch = 0 : i64, scratch_operands = 0 : i64, tpu.core_type = #tpu.core_type<tc>, window_params = [{transform_indices = @transform_0, window_bounds = array<i64: 8, 256>}, {transform_indices = @transform_1, window_bounds = array<i64: 8, 256>}]} {
    %c0 = arith.constant 0 : index
    %c0_0 = arith.constant 0 : index
    %0 = vector.load %arg1[%c0, %c0_0] : memref<8x256xf32, #tpu.memory_space<vmem>>, vector<8x256xf32>
    %cst = arith.constant 3.000000e+00 : f32
    %1 = vector.broadcast %cst : f32 to vector<8x256xf32>
    %2 = arith.addf %0, %1 : vector<8x256xf32>
    %cst_1 = arith.constant 0.000000e+00 : f32
    %cst_2 = arith.constant 6.000000e+00 : f32
    %3 = vector.broadcast %cst_1 : f32 to vector<8x256xf32>
    %4 = arith.maximumf %3, %2 : vector<8x256xf32>
    %5 = vector.broadcast %cst_2 : f32 to vector<8x256xf32>
    %6 = arith.minimumf %5, %4 : vector<8x256xf32>
    %cst_3 = arith.constant 0.166666672 : f32
    %7 = vector.broadcast %cst_3 : f32 to vector<8x256xf32>
    %8 = arith.mulf %6, %7 : vector<8x256xf32>
    %9 = arith.mulf %0, %8 : vector<8x256xf32>
    %c0_4 = arith.constant 0 : index
    %c0_5 = arith.constant 0 : index
    %10 = vector.load %arg2[%c0_4, %c0_5] : memref<8x256xf32, #tpu.memory_space<vmem>>, vector<8x256xf32>
    tpu.vector_store %arg2[%c0_4, %c0_5], %9 {strides = array<i32>} : memref<8x256xf32, #tpu.memory_space<vmem>>, vector<8x256xf32>,
    return
  }
  func.func @transform_0(%arg0: i32) -> (i32, i32) {
    %c0_i32 = arith.constant 0 : i32
    %c0_i32_0 = arith.constant 0 : i32
    return %arg0, %c0_i32 : i32, i32
  }
  func.func @transform_1(%arg0: i32) -> (i32, i32) {
    %c0_i32 = arith.constant 0 : i32
    %c0_i32_0 = arith.constant 0 : i32
    return %arg0, %c0_i32 : i32, i32
  }
}

</mosaic_0001>

<llo_original>
// kernel: h_swish.1
$region0: #{h_swish.1}
  #allocation0 [shape = 'u32[]', space=smem, size = 0x4, offset = 0x4, fixed_abs, tag = 'smem constant byte address 0x4 - core index']
  #allocation1 [shape = 'u32[144,128]{1,0:T(1,128)}', space=vmem, size = 0x12000, scoped, tag = 'internal scratch']
  %s0 = inlined_call_operand.vmem [shape: f32[8,256], index: 0, kind: input, shape index: {}]
  %s1 = inlined_call_operand.vmem [shape: f32[8,256], index: 1, kind: output, shape index: {}]
  %s2 = sld [smem:[#allocation0]]
  $region14: #{h_swish.1} parent=0
    _
  %s4 = ssub.s32 1, %s2
  %s5 = scalar_select 0, %s4, %s2
  // Predicated region
  $region2: #{h_swish.1} parent=0 // pred_check
    _
  $region3: #{h_swish.1} parent=0 // pred_check_branch
    %7 = sbr.rel (0) target = $region5
  $region4: #{h_swish.1} parent=0 // pred_region
    _
  $region5: #{h_swish.1} parent=0 // pred_fallthru
    _
  %v8 = vld [vmem:[%s0] sm:$0xff]
  %v9 = vld [vmem:[%s0 + $0x8] sm:$0xff]
  %v10 = vadd.f32 %v8, 3.0
  %v11 = vadd.f32 %v9, 3.0
  %v12 = vmax.f32 %v10, 0.0
  %v13 = vmax.f32 %v11, 0.0
  %v14 = vmin.f32 %v12, 6.0
  %v15 = vmin.f32 %v13, 6.0
  %v16 = vmul.f32 %v14, 0.16666667
  %v17 = vmul.f32 %v15, 0.16666667
  %v18 = vmul.f32 %v8, %v16
  %v19 = vmul.f32 %v9, %v17
  %20 = vst [vmem:[%s1] sm:$0xff] %v18
  %21 = vst [vmem:[%s1 + $0x8] sm:$0xff] %v19
  // Predicated region
  $region6: #{h_swish.1} parent=0 // pred_check
    _
  $region7: #{h_swish.1} parent=0 // pred_check_branch
    %23 = sbr.rel (0) target = $region9
  $region8: #{h_swish.1} parent=0 // pred_region
    _
  $region9: #{h_swish.1} parent=0 // pred_fallthru
    _
  // Predicated region
  $region10: #{h_swish.1} parent=0 // pred_check
    _
  $region11: #{h_swish.1} parent=0 // pred_check_branch
    %25 = sbr.rel (0) target = $region13
  $region12: #{h_swish.1} parent=0 // pred_region
    _
  $region13: #{h_swish.1} parent=0 // pred_fallthru
    _

</llo_original>
